<compile_context>
chip_gen: v5e
topology: v5e:2x2
jax: 0.10.0
libtpu: 0.0.40
codegen_flags: <defaults>
</compile_context>

<pallas_src>
import jax
import jax.numpy as jnp
from jax import lax
from jax.experimental import pallas as pl
from jax.experimental.pallas import tpu as pltpu


def _round_up(n, m):
    return ((n + m - 1) // m) * m


def _mlp_kernel(x_ref, w1_ref, b1_ref, w2_ref, b2_ref, w3_ref, b3_ref, o_ref):
    """out_row = w3 @ relu(w2T @ relu(w1T @ x^T + b1) + b2) + b3  (lane-dense)."""
    # Layer 1 as an NT contraction: w1T (H, lat) x x (bt, lat) contracted on the
    # last dims -> (H, bt).  x is cast in-kernel (VPU, hidden under the DMA); no
    # wrapper pass over x in HBM, no materialized transpose.
    x = x_ref[...].astype(w1_ref.dtype)                                 # (bt, lat)
    h1 = lax.dot_general(w1_ref[...], x,
                         dimension_numbers=(((1,), (1,)), ((), ())),
                         preferred_element_type=jnp.float32)            # (H, bt)
    h1 = jnp.maximum(h1 + b1_ref[...], 0.0)                             # lane-dense

    # Layer 2: keep everything f32 (tiny weight, no re-pack of h1).
    h2 = jnp.dot(w2_ref[...], h1, preferred_element_type=jnp.float32)   # (H2, bt)
    h2 = jnp.maximum(h2 + b2_ref[...], 0.0)

    # Layer 3 (H2 -> 1): (1, H2) @ (H2, bt) -> lane-dense (1, bt) row; b3 scalar
    # comes from SMEM.
    row = jnp.dot(w3_ref[...], h2, preferred_element_type=jnp.float32) + b3_ref[0]
    o_ref[...] = row.astype(o_ref.dtype)


def discriminator_forward(x, params, *, batch_tile=None,
                          compute_dtype=jnp.float32):
    """Pallas TPU forward pass of the Discriminator MLP.

    x: (B, lat_v_D); params: w1 (lat, H), b1 (1, H), w2 (H, H2), b2 (1, H2),
    w3 (H2, 1), b3 (1, 1).  Returns (B, 1) float32.
    compute_dtype only affects the layer-1 weight / x cast (f32 = exact parity
    with the PyTorch module; bf16 is an opt-in speed path).
    """
    B, lat = x.shape
    H = params["w1"].shape[1]
    H2 = params["w2"].shape[1]

    # Large, 256-aligned batch tiles (amortize the ~0.35 us per-grid-step cost,
    # fill the 256-wide MXU N dim on v6e/v7x) while keeping >= ~4 grid steps for
    # pipelining / megacore when B is big enough.
    if batch_tile is None:
        batch_tile = min(16384, max(256, _round_up(pl.cdiv(B, 4), 256)))
    batch_tile = max(128, _round_up(batch_tile, 128))
    grid_n = pl.cdiv(B, batch_tile)
    Bp = grid_n * batch_tile        # output is dense; x's last block may be ragged

    # Tiny weights: pre-transpose to hidden-major (free, done once).  Only the
    # layer-1 weight takes the (optional) narrow dtype; the rest stays f32.
    w1t = params["w1"].T.astype(compute_dtype)                 # (H, lat)
    b1c = params["b1"].reshape(H, 1).astype(jnp.float32)       # (H, 1)
    w2t = params["w2"].T.astype(jnp.float32)                   # (H2, H)
    b2c = params["b2"].reshape(H2, 1).astype(jnp.float32)      # (H2, 1)
    w3r = params["w3"].reshape(1, H2).astype(jnp.float32)      # (1, H2)
    b3 = params["b3"].reshape(1).astype(jnp.float32)           # scalar -> SMEM

    cost = pl.CostEstimate(
        flops=2 * B * (lat * H + H * H2 + H2),
        transcendentals=0,
        bytes_accessed=(B * lat * x.dtype.itemsize              # x, single pass
                        + Bp * 4                                # output row
                        + w1t.size * jnp.dtype(compute_dtype).itemsize
                        + 4 * (w2t.size + w3r.size + H + H2 + 1)),
    )

    out = pl.pallas_call(
        _mlp_kernel,
        out_shape=jax.ShapeDtypeStruct((1, Bp), jnp.float32),
        grid_spec=pltpu.PrefetchScalarGridSpec(
            num_scalar_prefetch=0,
            grid=(grid_n,),
            in_specs=[
                pl.BlockSpec((batch_tile, lat), lambda i: (i, 0)),   # x (native dt)
                pl.BlockSpec((H, lat), lambda i: (0, 0)),            # w1^T
                pl.BlockSpec((H, 1), lambda i: (0, 0)),              # b1 column
                pl.BlockSpec((H2, H), lambda i: (0, 0)),             # w2^T
                pl.BlockSpec((H2, 1), lambda i: (0, 0)),             # b2 column
                pl.BlockSpec((1, H2), lambda i: (0, 0)),             # w3 row
                pl.BlockSpec(memory_space=pltpu.MemorySpace.SMEM),   # b3 scalar
            ],
            out_specs=pl.BlockSpec((1, batch_tile), lambda i: (0, i)),
        ),
        compiler_params=pltpu.CompilerParams(
            dimension_semantics=("parallel",),
            vmem_limit_bytes=48 * 1024 * 1024,
        ),
        cost_estimate=cost,
    )(x, w1t, b1c, w2t, b2c, w3r, b3)

    # Lane-dense (1, Bp) row -> (B, 1); ragged-tail garbage columns are dropped.
    return out[0, :B].reshape(B, 1)


def init_discriminator_params(key, lat_v_D, dis_hid_D):
    """nn.Linear-style U(-1/sqrt(fan_in), 1/sqrt(fan_in)) init.
    Weights stored as (in_dim, out_dim); biases as (1, out_dim)."""
    h2 = dis_hid_D // 2
    ks = jax.random.split(key, 6)

    def lin(kw, kb, fan_in, fan_out):
        bound = 1.0 / jnp.sqrt(float(fan_in))
        w = jax.random.uniform(kw, (fan_in, fan_out), jnp.float32, -bound, bound)
        b = jax.random.uniform(kb, (1, fan_out), jnp.float32, -bound, bound)
        return w, b

    w1, b1 = lin(ks[0], ks[1], lat_v_D, dis_hid_D)
    w2, b2 = lin(ks[2], ks[3], dis_hid_D, h2)
    w3, b3 = lin(ks[4], ks[5], h2, 1)
    return {"w1": w1, "b1": b1, "w2": w2, "b2": b2, "w3": w3, "b3": b3}


def discriminator_reference(x, p):
    """Pure-JAX f32 reference with the exact PyTorch module semantics."""
    h1 = jnp.maximum(jnp.dot(x, p["w1"], preferred_element_type=jnp.float32)
                     + p["b1"], 0.0)
    h2 = jnp.maximum(jnp.dot(h1, p["w2"], preferred_element_type=jnp.float32)
                     + p["b2"], 0.0)
    return jnp.dot(h2, p["w3"], preferred_element_type=jnp.float32) + p["b3"]


if __name__ == "__main__":
    lat_v_D = 32    # latent vector dim
    dis_hid_D = 32  # hidden dim (second hidden = 16)
    batch = 8

    key = jax.random.PRNGKey(0)
    kx, kp = jax.random.split(key)
    x = jax.random.normal(kx, (batch, lat_v_D), dtype=jnp.float32)
    params = init_discriminator_params(kp, lat_v_D, dis_hid_D)

    # 1) Default f32 path: exact PyTorch-module semantics.
    out = jax.block_until_ready(discriminator_forward(x, params))
    ref = discriminator_reference(x, params)
    assert out.shape == (batch, 1)
    assert jnp.allclose(out, ref, atol=1e-4, rtol=1e-4)

    # 2) Opt-in bf16 layer-1 path (x cast in-kernel, no extra HBM pass).
    out_bf = jax.block_until_ready(
        discriminator_forward(x, params, compute_dtype=jnp.bfloat16))
    assert jnp.allclose(out_bf, ref, atol=3e-2, rtol=3e-2)

    # 3) Multi-step grid + ragged batch tail (B not a multiple of the tile),
    #    handled with cdiv grid — no padded copy of x.
    B2 = 700
    x2 = jax.random.normal(jax.random.PRNGKey(1), (B2, lat_v_D), jnp.float32)
    out2 = jax.block_until_ready(
        discriminator_forward(x2, params, batch_tile=256))
    ref2 = discriminator_reference(x2, params)
    assert out2.shape == (B2, 1)
    assert jnp.allclose(out2, ref2, atol=1e-4, rtol=1e-4)

    print("KERNEL_OK")
</pallas_src>

<mosaic_0001>
module attributes {stable_mosaic.version = 11 : i64} {
  func.func @_mlp_kernel(%arg0: i32, %arg1: memref<256x32xf32, #tpu.memory_space<vmem>>, %arg2: memref<32x32xf32, #tpu.memory_space<vmem>>, %arg3: memref<32x1xf32, #tpu.memory_space<vmem>>, %arg4: memref<16x32xf32, #tpu.memory_space<vmem>>, %arg5: memref<16x1xf32, #tpu.memory_space<vmem>>, %arg6: memref<1x16xf32, #tpu.memory_space<vmem>>, %arg7: memref<1xf32, #tpu.memory_space<smem>>, %arg8: memref<1x256xf32, #tpu.memory_space<vmem>>) attributes {dimension_semantics = [#tpu.dimension_semantics<parallel>], iteration_bounds = array<i64: 1>, scalar_prefetch = 0 : i64, scratch_operands = 0 : i64, tpu.core_type = #tpu.core_type<tc>, window_params = [{transform_indices = @transform_0, window_bounds = array<i64: 256, 32>}, {pipeline_mode = #tpu.pipeline_mode<synchronous>, transform_indices = @transform_1, window_bounds = array<i64: 32, 32>}, {pipeline_mode = #tpu.pipeline_mode<synchronous>, transform_indices = @transform_2, window_bounds = array<i64: 32, 1>}, {pipeline_mode = #tpu.pipeline_mode<synchronous>, transform_indices = @transform_3, window_bounds = array<i64: 16, 32>}, {pipeline_mode = #tpu.pipeline_mode<synchronous>, transform_indices = @transform_4, window_bounds = array<i64: 16, 1>}, {pipeline_mode = #tpu.pipeline_mode<synchronous>, transform_indices = @transform_5, window_bounds = array<i64: 1, 16>}, {transform_indices = @transform_6, window_bounds = array<i64: 1>}, {transform_indices = @transform_7, window_bounds = array<i64: 1, 256>}]} {
    %c0 = arith.constant 0 : index
    %c0_0 = arith.constant 0 : index
    %0 = vector.load %arg1[%c0, %c0_0] : memref<256x32xf32, #tpu.memory_space<vmem>>, vector<256x32xf32>
    %c0_1 = arith.constant 0 : index
    %c0_2 = arith.constant 0 : index
    %1 = vector.load %arg2[%c0_1, %c0_2] : memref<32x32xf32, #tpu.memory_space<vmem>>, vector<32x32xf32>
    %cst = arith.constant dense<0.000000e+00> : vector<32x256xf32>
    %2 = tpu.matmul %1, %0, %cst {dimension_numbers = #tpu.dot_dimension_numbers<[1], [1], [0], [0], [0, 0, 1, 0], [], []>} : vector<32x32xf32>, vector<256x32xf32>, vector<32x256xf32> -> vector<32x256xf32>
    %c0_3 = arith.constant 0 : index
    %c0_4 = arith.constant 0 : index
    %3 = vector.load %arg3[%c0_3, %c0_4] : memref<32x1xf32, #tpu.memory_space<vmem>>, vector<32x1xf32>
    %4 = vector.broadcast %3 : vector<32x1xf32> to vector<32x256xf32>
    %5 = arith.addf %2, %4 : vector<32x256xf32>
    %cst_5 = arith.constant 0.000000e+00 : f32
    %6 = vector.broadcast %cst_5 : f32 to vector<32x256xf32>
    %7 = arith.maximumf %5, %6 : vector<32x256xf32>
    %c0_6 = arith.constant 0 : index
    %c0_7 = arith.constant 0 : index
    %8 = vector.load %arg4[%c0_6, %c0_7] : memref<16x32xf32, #tpu.memory_space<vmem>>, vector<16x32xf32>
    %cst_8 = arith.constant dense<0.000000e+00> : vector<16x256xf32>
    %9 = tpu.matmul %8, %7, %cst_8 {dimension_numbers = #tpu.dot_dimension_numbers<[1], [0], [0], [1], [0, 0, 1, 1], [], []>} : vector<16x32xf32>, vector<32x256xf32>, vector<16x256xf32> -> vector<16x256xf32>
    %c0_9 = arith.constant 0 : index
    %c0_10 = arith.constant 0 : index
    %10 = vector.load %arg5[%c0_9, %c0_10] : memref<16x1xf32, #tpu.memory_space<vmem>>, vector<16x1xf32>
    %11 = vector.broadcast %10 : vector<16x1xf32> to vector<16x256xf32>
    %12 = arith.addf %9, %11 : vector<16x256xf32>
    %cst_11 = arith.constant 0.000000e+00 : f32
    %13 = vector.broadcast %cst_11 : f32 to vector<16x256xf32>
    %14 = arith.maximumf %12, %13 : vector<16x256xf32>
    %c0_12 = arith.constant 0 : index
    %c0_13 = arith.constant 0 : index
    %15 = vector.load %arg6[%c0_12, %c0_13] : memref<1x16xf32, #tpu.memory_space<vmem>>, vector<1x16xf32>
    %cst_14 = arith.constant dense<0.000000e+00> : vector<1x256xf32>
    %16 = tpu.matmul %15, %14, %cst_14 {dimension_numbers = #tpu.dot_dimension_numbers<[1], [0], [0], [1], [0, 0, 1, 1], [], []>} : vector<1x16xf32>, vector<16x256xf32>, vector<1x256xf32> -> vector<1x256xf32>
    %c0_15 = arith.constant 0 : index
    %17 = memref.load %arg7[%c0_15] : memref<1xf32, #tpu.memory_space<smem>>
    %18 = vector.broadcast %17 : f32 to vector<1x256xf32>
    %19 = arith.addf %16, %18 : vector<1x256xf32>
    %c0_16 = arith.constant 0 : index
    %c0_17 = arith.constant 0 : index
    %20 = vector.load %arg8[%c0_16, %c0_17] : memref<1x256xf32, #tpu.memory_space<vmem>>, vector<1x256xf32>
    tpu.vector_store %arg8[%c0_16, %c0_17], %19 {strides = array<i32>} : memref<1x256xf32, #tpu.memory_space<vmem>>, vector<1x256xf32>,
    return
  }
  func.func @transform_0(%arg0: i32) -> (i32, i32) {
    %c0_i32 = arith.constant 0 : i32
    %c0_i32_0 = arith.constant 0 : i32
    return %arg0, %c0_i32 : i32, i32
  }
  func.func @transform_1(%arg0: i32) -> (i32, i32) {
    %c0_i32 = arith.constant 0 : i32
    %c0_i32_0 = arith.constant 0 : i32
    %c0_i32_1 = arith.constant 0 : i32
    return %c0_i32, %c0_i32_0 : i32, i32
  }
  func.func @transform_2(%arg0: i32) -> (i32, i32) {
    %c0_i32 = arith.constant 0 : i32
    %c0_i32_0 = arith.constant 0 : i32
    %c0_i32_1 = arith.constant 0 : i32
    return %c0_i32, %c0_i32_0 : i32, i32
  }
  func.func @transform_3(%arg0: i32) -> (i32, i32) {
    %c0_i32 = arith.constant 0 : i32
    %c0_i32_0 = arith.constant 0 : i32
    %c0_i32_1 = arith.constant 0 : i32
    return %c0_i32, %c0_i32_0 : i32, i32
  }
  func.func @transform_4(%arg0: i32) -> (i32, i32) {
    %c0_i32 = arith.constant 0 : i32
    %c0_i32_0 = arith.constant 0 : i32
    %c0_i32_1 = arith.constant 0 : i32
    return %c0_i32, %c0_i32_0 : i32, i32
  }
  func.func @transform_5(%arg0: i32) -> (i32, i32) {
    %c0_i32 = arith.constant 0 : i32
    %c0_i32_0 = arith.constant 0 : i32
    %c0_i32_1 = arith.constant 0 : i32
    return %c0_i32, %c0_i32_0 : i32, i32
  }
  func.func @transform_6(%arg0: i32) -> i32 {
    %c0_i32 = arith.constant 0 : i32
    %c0_i32_0 = arith.constant 0 : i32
    return %c0_i32 : i32
  }
  func.func @transform_7(%arg0: i32) -> (i32, i32) {
    %c0_i32 = arith.constant 0 : i32
    %c0_i32_0 = arith.constant 0 : i32
    return %c0_i32, %arg0 : i32, i32
  }
}

</mosaic_0001>

<llo_original>
// kernel: tpu_custom_call.1
$region0: #{tpu_custom_call.1}
  #allocation0 [shape = 'u32[]', space=smem, size = 0x4, offset = 0x4, fixed_abs, tag = 'smem constant byte address 0x4 - core index']
  #allocation1 [shape = 'u32[72,128]{1,0:T(1,128)}', space=vmem, size = 0x9000, scoped, tag = 'internal scratch']
  #allocation2 [shape = 'f32[1]{0:T(128)S(6)}', space=smem, size = 0x200, scoped, tag = 'scoped memory for tpu_custom_call.1']
  %s0 = inlined_call_operand.hbm [shape: f32[8,32], index: 0, kind: input, shape index: {}]
  %s1 = inlined_call_operand.vmem [shape: f32[32,32], index: 1, kind: input, shape index: {}]
  %s2 = inlined_call_operand.vmem [shape: f32[32,1], index: 2, kind: input, shape index: {}]
  %s3 = inlined_call_operand.vmem [shape: f32[16,32], index: 3, kind: input, shape index: {}]
  %s4 = inlined_call_operand.vmem [shape: f32[16,1], index: 4, kind: input, shape index: {}]
  %s5 = inlined_call_operand.vmem [shape: f32[1,16], index: 5, kind: input, shape index: {}]
  %s6 = inlined_call_operand.<no memory space> [shape: f32[1], index: 6, kind: input, shape index: {}]
  %s7 = inlined_call_operand.hbm [shape: f32[1,256], index: 7, kind: output, shape index: {}]
  %s8 = sld [smem:[#allocation0]]
  $region42: #{tpu_custom_call.1} parent=0
    _
  %s10 = ssub.s32 1, %s8
  %s11 = scalar_select 0, %s10, %s8
  %12 = sst [smem:[#allocation2]] %s6
  $region1: #{tpu_custom_call.1} parent=0
    #allocation3 [shape = 'u8[131072]{0}', space=vmem, size = 0x20000, scoped, tag = 'input window, operand 0, single buffered']
    #allocation4 [shape = 's32[1]{0}', space=sflag, size = 0x4, scoped, tag = 'scoped memory for tpu_custom_call.1']
    #allocation5 [shape = 's32[1]{0}', space=sflag, size = 0x4, scoped, tag = 'scoped memory for tpu_custom_call.1']
    #allocation6 [shape = 'u8[1024]{0}', space=vmem, size = 0x400, scoped, tag = 'output window, operand 0, single buffered']
    %13 = vsyncpa [#allocation4], 0
    %14 = vsyncpa [#allocation5], 0
    // Predicated region
    $region2: #{tpu_custom_call.1} parent=1 // pred_check
      _
    $region3: #{tpu_custom_call.1} parent=1 // pred_check_branch
      %16 = sbr.rel (0) target = $region5
    $region4: #{tpu_custom_call.1} parent=1 // pred_region
      %18 = vsyncadd [#allocation4], 3968
      %s19 = sshll.u32 %s0, 4
      %s20 = int_to_ptr.hbm [resolvable:$true] %s19
      %s21 = sshll.u32 [#allocation3], 4
      %s22 = int_to_ptr.vmem [resolvable:$true] %s21
      %27 = dma.hbm_to_vmem [thread:$0]  %s20, 128, %s22, [#allocation4], 128, 128, 8
    $region5: #{tpu_custom_call.1} parent=1 // pred_fallthru
      _
    // Predicated region
    $region6: #{tpu_custom_call.1} parent=1 // pred_check
      _
    $region7: #{tpu_custom_call.1} parent=1 // pred_check_branch
      %29 = sbr.rel (0) target = $region9
    $region8: #{tpu_custom_call.1} parent=1 // pred_region
      _
    $region9: #{tpu_custom_call.1} parent=1 // pred_fallthru
      _
    // Predicated region
    $region10: #{tpu_custom_call.1} parent=1 // pred_check
      _
    $region11: #{tpu_custom_call.1} parent=1 // pred_check_branch
      %31 = sbr.rel (0) target = $region13
    $region12: #{tpu_custom_call.1} parent=1 // pred_region
      _
    $region13: #{tpu_custom_call.1} parent=1 // pred_fallthru
      _
    // Predicated region
    $region14: #{tpu_custom_call.1} parent=1 // pred_check
      _
    $region15: #{tpu_custom_call.1} parent=1 // pred_check_branch
      %33 = sbr.rel (0) target = $region17
    $region16: #{tpu_custom_call.1} parent=1 // pred_region
      _
    $region17: #{tpu_custom_call.1} parent=1 // pred_fallthru
      _
    // Predicated region
    $region18: #{tpu_custom_call.1} parent=1 // pred_check
      _
    $region19: #{tpu_custom_call.1} parent=1 // pred_check_branch
      %35 = sbr.rel (0) target = $region21
    $region20: #{tpu_custom_call.1} parent=1 // pred_region
      _
    $region21: #{tpu_custom_call.1} parent=1 // pred_fallthru
      _
    // Predicated region
    $region22: #{tpu_custom_call.1} parent=1 // pred_check
      _
    $region23: #{tpu_custom_call.1} parent=1 // pred_check_branch
      %37 = sbr.rel (0) target = $region25
    $region24: #{tpu_custom_call.1} parent=1 // pred_region
      _
    $region25: #{tpu_custom_call.1} parent=1 // pred_fallthru
      _
    // Predicated region
    $region26: #{tpu_custom_call.1} parent=1 // pred_check
      _
    $region27: #{tpu_custom_call.1} parent=1 // pred_check_branch
      %39 = sbr.rel (0) target = $region29
    $region28: #{tpu_custom_call.1} parent=1 // pred_region
      _
    $region29: #{tpu_custom_call.1} parent=1 // pred_fallthru
      _
    // Predicated region
    $region30: #{tpu_custom_call.1} parent=1 // pred_check
      _
    $region31: #{tpu_custom_call.1} parent=1 // pred_check_branch
      %41 = sbr.rel (0) target = $region33
    $region32: #{tpu_custom_call.1} parent=1 // pred_region
      %43 = dma.done [#allocation4], 4096
    $region33: #{tpu_custom_call.1} parent=1 // pred_fallthru
      _
    %v44 = vld [vmem:[#allocation3] sm:$0xff]
    %v45 = vld [vmem:[#allocation3 + $0x8] sm:$0xff]
    %v46 = vld [vmem:[#allocation3 + $0x10] sm:$0xff]
    %v47 = vld [vmem:[#allocation3 + $0x18] sm:$0xff]
    %v48 = vld [vmem:[#allocation3 + $0x20] sm:$0xff]
    %v49 = vld [vmem:[#allocation3 + $0x28] sm:$0xff]
    %v50 = vld [vmem:[#allocation3 + $0x30] sm:$0xff]
    %v51 = vld [vmem:[#allocation3 + $0x38] sm:$0xff]
    %v52 = vld [vmem:[#allocation3 + $0x40] sm:$0xff]
    %v53 = vld [vmem:[#allocation3 + $0x48] sm:$0xff]
    %v54 = vld [vmem:[#allocation3 + $0x50] sm:$0xff]
    %v55 = vld [vmem:[#allocation3 + $0x58] sm:$0xff]
    %v56 = vld [vmem:[#allocation3 + $0x60] sm:$0xff]
    %v57 = vld [vmem:[#allocation3 + $0x68] sm:$0xff]
    %v58 = vld [vmem:[#allocation3 + $0x70] sm:$0xff]
    %v59 = vld [vmem:[#allocation3 + $0x78] sm:$0xff]
    %v60 = vld [vmem:[#allocation3 + $0x80] sm:$0xff]
    %v61 = vld [vmem:[#allocation3 + $0x88] sm:$0xff]
    %v62 = vld [vmem:[#allocation3 + $0x90] sm:$0xff]
    %v63 = vld [vmem:[#allocation3 + $0x98] sm:$0xff]
    %v64 = vld [vmem:[#allocation3 + $0xa0] sm:$0xff]
    %v65 = vld [vmem:[#allocation3 + $0xa8] sm:$0xff]
    %v66 = vld [vmem:[#allocation3 + $0xb0] sm:$0xff]
    %v67 = vld [vmem:[#allocation3 + $0xb8] sm:$0xff]
    %v68 = vld [vmem:[#allocation3 + $0xc0] sm:$0xff]
    %v69 = vld [vmem:[#allocation3 + $0xc8] sm:$0xff]
    %v70 = vld [vmem:[#allocation3 + $0xd0] sm:$0xff]
    %v71 = vld [vmem:[#allocation3 + $0xd8] sm:$0xff]
    %v72 = vld [vmem:[#allocation3 + $0xe0] sm:$0xff]
    %v73 = vld [vmem:[#allocation3 + $0xe8] sm:$0xff]
    %v74 = vld [vmem:[#allocation3 + $0xf0] sm:$0xff]
    %v75 = vld [vmem:[#allocation3 + $0xf8] sm:$0xff]
    %v76 = vld [vmem:[%s1] sm:$0xff]
    %v77 = vld [vmem:[%s1 + $0x8] sm:$0xff]
    %v78 = vld [vmem:[%s1 + $0x10] sm:$0xff]
    %v79 = vld [vmem:[%s1 + $0x18] sm:$0xff]
    %v80 = vld [vmem:[%s2] sm:$0xff]
    %v81 = vld [vmem:[%s2 + $0x8] sm:$0xff]
    %v82 = vld [vmem:[%s2 + $0x10] sm:$0xff]
    %v83 = vld [vmem:[%s2 + $0x18] sm:$0xff]
    %85 = vset.pattern.permute.xlu0 0
    %86 = vperm.xlu0 %85, %v80
    %v87 = vpop.permute.xlu0 %86
    %90 = vset.pattern.permute.xlu0 0
    %91 = vperm.xlu0 %90, %v81
    %v92 = vpop.permute.xlu0 %91
    %95 = vset.pattern.permute.xlu0 0
    %96 = vperm.xlu0 %95, %v82
    %v97 = vpop.permute.xlu0 %96
    %100 = vset.pattern.permute.xlu0 0
    %101 = vperm.xlu0 %100, %v83
    %v102 = vpop.permute.xlu0 %101
    %vm104 = vcmask 261120
    %v106 = vsel %vm104, %v76, 0
    %v109 = vsel %vm104, %v77, 0
    %v112 = vsel %vm104, %v78, 0
    %v115 = vsel %vm104, %v79, 0
    %v118 = vsel %vm104, %v44, 0
    %v121 = vsel %vm104, %v45, 0
    %v124 = vsel %vm104, %v46, 0
    %v127 = vsel %vm104, %v47, 0
    %v130 = vsel %vm104, %v48, 0
    %v133 = vsel %vm104, %v49, 0
    %v136 = vsel %vm104, %v50, 0
    %v139 = vsel %vm104, %v51, 0
    %v142 = vsel %vm104, %v52, 0
    %v145 = vsel %vm104, %v53, 0
    %v148 = vsel %vm104, %v54, 0
    %v151 = vsel %vm104, %v55, 0
    %v154 = vsel %vm104, %v56, 0
    %v157 = vsel %vm104, %v57, 0
    %v160 = vsel %vm104, %v58, 0
    %v163 = vsel %vm104, %v59, 0
    %v166 = vsel %vm104, %v60, 0
    %v169 = vsel %vm104, %v61, 0
    %v172 = vsel %vm104, %v62, 0
    %v175 = vsel %vm104, %v63, 0
    %v178 = vsel %vm104, %v64, 0
    %v181 = vsel %vm104, %v65, 0
    %v184 = vsel %vm104, %v66, 0
    %v187 = vsel %vm104, %v67, 0
    %v190 = vsel %vm104, %v68, 0
    %v193 = vsel %vm104, %v69, 0
    %v196 = vsel %vm104, %v70, 0
    %v199 = vsel %vm104, %v71, 0
    %v202 = vsel %vm104, %v72, 0
    %v205 = vsel %vm104, %v73, 0
    %v208 = vsel %vm104, %v74, 0
    %v211 = vsel %vm104, %v75, 0
    %213 = vmatpush.xpose.msra.mxu0 %v163
    %214 = vmatpush.xpose.msra.mxu0 %v160
    %215 = vmatpush.xpose.msra.mxu0 %v157
    %216 = vmatpush.xpose.msra.mxu0 %v154
    %217 = vmatpush.xpose.msra.mxu0 %v151
    %218 = vmatpush.xpose.msra.mxu0 %v148
    %219 = vmatpush.xpose.msra.mxu0 %v145
    %220 = vmatpush.xpose.msra.mxu0 %v142
    %221 = vmatpush.xpose.msra.mxu0 %v139
    %222 = vmatpush.xpose.msra.mxu0 %v136
    %223 = vmatpush.xpose.msra.mxu0 %v133
    %224 = vmatpush.xpose.msra.mxu0 %v130
    %225 = vmatpush.xpose.msra.mxu0 %v127
    %226 = vmatpush.xpose.msra.mxu0 %v124
    %227 = vmatpush.xpose.msra.mxu0 %v121
    %228 = vmatpush.xpose.msra.mxu0 %v118
    %229 = vmatmul.f32.gmra.mxu0 %v106
    %v230 = vpop.f32.mrf.mxu0
    %v231 = vadd.f32 %v87, %v230
    %232 = vmatmul.f32.gmra.mxu0 %v109
    %v233 = vpop.f32.mrf.mxu0
    %v234 = vadd.f32 %v92, %v233
    %235 = vmatmul.f32.gmra.mxu0 %v112
    %v236 = vpop.f32.mrf.mxu0
    %v237 = vadd.f32 %v97, %v236
    %238 = vmatmul.f32.gmra.mxu0 %v115
    %v239 = vpop.f32.mrf.mxu0
    %v240 = vadd.f32 %v102, %v239
    %241 = vdwg.mxu0
    %242 = vmatpush.xpose.msra.mxu0 %v211
    %243 = vmatpush.xpose.msra.mxu0 %v208
    %244 = vmatpush.xpose.msra.mxu0 %v205
    %245 = vmatpush.xpose.msra.mxu0 %v202
    %246 = vmatpush.xpose.msra.mxu0 %v199
    %247 = vmatpush.xpose.msra.mxu0 %v196
    %248 = vmatpush.xpose.msra.mxu0 %v193
    %249 = vmatpush.xpose.msra.mxu0 %v190
    %250 = vmatpush.xpose.msra.mxu0 %v187
    %251 = vmatpush.xpose.msra.mxu0 %v184
    %252 = vmatpush.xpose.msra.mxu0 %v181
    %253 = vmatpush.xpose.msra.mxu0 %v178
    %254 = vmatpush.xpose.msra.mxu0 %v175
    %255 = vmatpush.xpose.msra.mxu0 %v172
    %256 = vmatpush.xpose.msra.mxu0 %v169
    %257 = vmatpush.xpose.msra.mxu0 %v166
    %258 = vmatmul.f32.gmra.mxu0 %v106
    %v259 = vpop.f32.mrf.mxu0
    %v260 = vadd.f32 %v87, %v259
    %261 = vmatmul.f32.gmra.mxu0 %v109
    %v262 = vpop.f32.mrf.mxu0
    %v263 = vadd.f32 %v92, %v262
    %264 = vmatmul.f32.gmra.mxu0 %v112
    %v265 = vpop.f32.mrf.mxu0
    %v266 = vadd.f32 %v97, %v265
    %267 = vmatmul.f32.gmra.mxu0 %v115
    %v268 = vpop.f32.mrf.mxu0
    %v269 = vadd.f32 %v102, %v268
    %270 = vdwg.mxu0
    %v271 = vmax.f32 %v231, 0.0
    %v272 = vmax.f32 %v260, 0.0
    %v273 = vmax.f32 %v234, 0.0
    %v274 = vmax.f32 %v263, 0.0
    %v275 = vmax.f32 %v237, 0.0
    %v276 = vmax.f32 %v266, 0.0
    %v277 = vmax.f32 %v240, 0.0
    %v278 = vmax.f32 %v269, 0.0
    %v279 = vld [vmem:[%s3] sm:$0xff]
    %v280 = vld [vmem:[%s3 + $0x8] sm:$0xff]
    %v281 = vld [vmem:[%s4] sm:$0xff]
    %v282 = vld [vmem:[%s4 + $0x8] sm:$0xff]
    %284 = vset.pattern.permute.xlu0 0
    %285 = vperm.xlu0 %284, %v281
    %v286 = vpop.permute.xlu0 %285
    %289 = vset.pattern.permute.xlu0 0
    %290 = vperm.xlu0 %289, %v282
    %v291 = vpop.permute.xlu0 %290
    %v294 = vsel %vm104, %v279, 0
    %v297 = vsel %vm104, %v280, 0
    %299 = vmatpush.msra.mxu0 0.0
    %300 = vmatpush.msra.mxu0 0.0
    %301 = vmatpush.msra.mxu0 0.0
    %302 = vmatpush.msra.mxu0 0.0
    %303 = vmatpush.msra.mxu0 0.0
    %304 = vmatpush.msra.mxu0 0.0
    %305 = vmatpush.msra.mxu0 0.0
    %306 = vmatpush.msra.mxu0 0.0
    %307 = vmatpush.msra.mxu0 0.0
    %308 = vmatpush.msra.mxu0 0.0
    %309 = vmatpush.msra.mxu0 0.0
    %310 = vmatpush.msra.mxu0 0.0
    %311 = vmatpush.msra.mxu0 %v277
    %312 = vmatpush.msra.mxu0 %v275
    %313 = vmatpush.msra.mxu0 %v273
    %314 = vmatpush.msra.mxu0 %v271
    %315 = vmatmul.f32.gmra.mxu0 %v294
    %v316 = vpop.f32.mrf.mxu0
    %v317 = vadd.f32 %v286, %v316
    %318 = vmatmul.f32.gmra.mxu0 %v297
    %v319 = vpop.f32.mrf.mxu0
    %v320 = vadd.f32 %v291, %v319
    %321 = vdwg.mxu0
    %322 = vmatpush.msra.mxu0 0.0
    %323 = vmatpush.msra.mxu0 0.0
    %324 = vmatpush.msra.mxu0 0.0
    %325 = vmatpush.msra.mxu0 0.0
    %326 = vmatpush.msra.mxu0 0.0
    %327 = vmatpush.msra.mxu0 0.0
    %328 = vmatpush.msra.mxu0 0.0
    %329 = vmatpush.msra.mxu0 0.0
    %330 = vmatpush.msra.mxu0 0.0
    %331 = vmatpush.msra.mxu0 0.0
    %332 = vmatpush.msra.mxu0 0.0
    %333 = vmatpush.msra.mxu0 0.0
    %334 = vmatpush.msra.mxu0 %v278
    %335 = vmatpush.msra.mxu0 %v276
    %336 = vmatpush.msra.mxu0 %v274
    %337 = vmatpush.msra.mxu0 %v272
    %338 = vmatmul.f32.gmra.mxu0 %v294
    %v339 = vpop.f32.mrf.mxu0
    %v340 = vadd.f32 %v286, %v339
    %341 = vmatmul.f32.gmra.mxu0 %v297
    %v342 = vpop.f32.mrf.mxu0
    %v343 = vadd.f32 %v291, %v342
    %344 = vdwg.mxu0
    %v345 = vmax.f32 %v317, 0.0
    %v346 = vmax.f32 %v340, 0.0
    %v347 = vmax.f32 %v320, 0.0
    %v348 = vmax.f32 %v343, 0.0
    %v349 = vld [vmem:[%s5] sm:$0x1]
    %s350 = sld [smem:[#allocation2]]
    %v351 = vstv %s350
    %vm352 = vcmask 130048
    %v354 = vsel %vm352, %v349, 0
    %356 = vmatpush.msra.mxu0 0.0
    %357 = vmatpush.msra.mxu0 0.0
    %358 = vmatpush.msra.mxu0 0.0
    %359 = vmatpush.msra.mxu0 0.0
    %360 = vmatpush.msra.mxu0 0.0
    %361 = vmatpush.msra.mxu0 0.0
    %362 = vmatpush.msra.mxu0 0.0
    %363 = vmatpush.msra.mxu0 0.0
    %364 = vmatpush.msra.mxu0 0.0
    %365 = vmatpush.msra.mxu0 0.0
    %366 = vmatpush.msra.mxu0 0.0
    %367 = vmatpush.msra.mxu0 0.0
    %368 = vmatpush.msra.mxu0 0.0
    %369 = vmatpush.msra.mxu0 0.0
    %370 = vmatpush.msra.mxu0 %v347
    %371 = vmatpush.msra.mxu0 %v345
    %372 = vmatmul.f32.gmra.mxu0 %v354
    %v373 = vpop.f32.mrf.mxu0
    %v374 = vadd.f32 %v351, %v373
    %375 = vdwg.mxu0
    %376 = vmatpush.msra.mxu0 0.0
    %377 = vmatpush.msra.mxu0 0.0
    %378 = vmatpush.msra.mxu0 0.0
    %379 = vmatpush.msra.mxu0 0.0
    %380 = vmatpush.msra.mxu0 0.0
    %381 = vmatpush.msra.mxu0 0.0
    %382 = vmatpush.msra.mxu0 0.0
    %383 = vmatpush.msra.mxu0 0.0
    %384 = vmatpush.msra.mxu0 0.0
    %385 = vmatpush.msra.mxu0 0.0
    %386 = vmatpush.msra.mxu0 0.0
    %387 = vmatpush.msra.mxu0 0.0
    %388 = vmatpush.msra.mxu0 0.0
    %389 = vmatpush.msra.mxu0 0.0
    %390 = vmatpush.msra.mxu0 %v348
    %391 = vmatpush.msra.mxu0 %v346
    %392 = vmatmul.f32.gmra.mxu0 %v354
    %v393 = vpop.f32.mrf.mxu0
    %v394 = vadd.f32 %v351, %v393
    %395 = vdwg.mxu0
    %v398 = vrot.slane %v394, 7
    %vm399 = vcmask 1040384
    %v400 = vsel %vm399, %v374, %v398
    %v402 = vlaneseq
    %vm403 = vcmp.ge.s32.totalorder %v402, 0
    %vm404 = vcmp.lt.s32.totalorder %v402, 256
    %vm405 = vmand %vm403, %vm404
    %406 = vst.msk [vmem:[#allocation6] sm:$0x3] %vm405, %v400
    // Predicated region
    $region34: #{tpu_custom_call.1} parent=1 // pred_check
      _
    $region35: #{tpu_custom_call.1} parent=1 // pred_check_branch
      %408 = sbr.rel (0) target = $region37
    $region36: #{tpu_custom_call.1} parent=1 // pred_region
      %410 = vsyncadd [#allocation5], 0
      %s412 = sshll.u32 [#allocation6], 4
      %s413 = int_to_ptr.vmem [resolvable:$true] %s412
      %s414 = sshll.u32 %s7, 4
      %s415 = int_to_ptr.hbm [resolvable:$true] %s414
      %417 = dma.vmem_to_hbm [thread:$0]  %s413, 32, %s415, [#allocation5]
    $region37: #{tpu_custom_call.1} parent=1 // pred_fallthru
      _
    // Predicated region
    $region38: #{tpu_custom_call.1} parent=1 // pred_check
      _
    $region39: #{tpu_custom_call.1} parent=1 // pred_check_branch
      %419 = sbr.rel (0) target = $region41
    $region40: #{tpu_custom_call.1} parent=1 // pred_region
      %421 = dma.done [#allocation5], 32
    $region41: #{tpu_custom_call.1} parent=1 // pred_fallthru
      _
    %422 = vsyncpa [#allocation4], 1
    %423 = vsyncpa [#allocation5], 1

</llo_original>
